<compile_context>
chip_gen: v7x
topology: tpu7x:2x2x1
jax: 0.10.0
libtpu: 0.0.40
codegen_flags: <defaults>
</compile_context>

<pallas_src>
import jax
import jax.numpy as jnp
from jax import lax
from jax.experimental import pallas as pl
from jax.experimental.pallas import tpu as pltpu


def _round_up(n: int, m: int) -> int:
    return (n + m - 1) // m * m


def mlp_kernel(x_ref, w1_ref, b1_ref, w2_ref, b2_ref, o_ref):
    # x_ref:  (TB, IN)   row-major batch tile, straight from HBM (no wrapper transpose)
    # w1_ref: (HID, IN)  PyTorch-native [out_features, in_features]
    # b1_ref: (HID, 1)
    # w2_ref: (HID, 1)   second-layer weight as a column
    # b2_ref: (1, 1)
    # o_ref:  (1, TB)    lane-dense output (batch on the lane axis)

    # Layer 1 on the MXU: contract the tiny feature axis of both operands,
    #   (HID, IN) . (TB, IN)^T -> (HID, TB)
    # (same dimension_numbers as the flash-attention q @ k^T pattern), so the
    # batch dimension lands on lanes for all downstream ops and the store.
    h = lax.dot_general(
        w1_ref[...], x_ref[...],
        dimension_numbers=(((1,), (1,)), ((), ())),
        preferred_element_type=jnp.float32,
    )
    # Bias (broadcast over lanes) + ReLU on the VPU.
    h = jnp.maximum(h + b1_ref[...], 0.0)

    # Layer 2 (out_features == 1): VPU multiply + sublane (XLU) reduce instead of
    # a 1-lane MXU matmul. Result is already (1, TB) -> unmasked lane-dense store.
    y = jnp.sum(h * w2_ref[...], axis=0, keepdims=True)
    o_ref[...] = y + b2_ref[...]


def mlp_forward(x, w1, b1, w2, b2, *, block_b=8192):
    """relu(x @ w1.T + b1) @ w2.T + b2  with PyTorch nn.Linear parameter layouts.

    x: [B, IN]; w1: [HID, IN]; b1: [HID]; w2: [1, HID]; b2: [1]
    """
    B, in_dim = x.shape
    hid = w1.shape[0]
    out_dim = w2.shape[0]
    assert out_dim == 1, "kernel specializes the out_features == 1 second layer"

    # Batch-tile selection (sweep block_b in {4096, 8192, 16384} on real workloads):
    #  * small B: one grid step, block == full array dims (no (8,128) issue).
    #  * large B: multiple-of-128 lane tiles, and at least 2 grid steps so
    #    dimension_semantics=("parallel",) can use both TensorCores on v7x.
    if B <= 1024:
        tb = B
    else:
        tb = min(block_b, _round_up(pl.cdiv(B, 2), 128))
    grid = (pl.cdiv(B, tb),)
    # If tb does not divide B, Pallas masks the tail block: out-of-bounds input
    # lanes compute throwaway values that never reach the (1, B) output.

    # Parameters in the shapes the kernel broadcasts against (all tiny; these
    # reshapes are layout-identical, no transpose copies).
    b1_col = b1.reshape(hid, 1)
    w2_col = w2.reshape(hid, 1)   # (1, HID) -> (HID, 1) == w2.T
    b2_2d = b2.reshape(1, 1)

    # Explicit VMEM budget so the large, overhead-amortizing tile compiles
    # without spills on all generations (v5e default scoped limit is 16 MiB;
    # v7x has only 64 MiB physical per TC, so stay well under that).
    lanes = _round_up(tb, 128)
    x_tile_bytes = _round_up(tb, 8) * 128 * 4        # (tb, IN) lane-pads IN -> 128
    h_bytes = _round_up(hid, 8) * lanes * 4          # (HID, tb) f32 intermediates
    o_tile_bytes = 8 * lanes * 4                     # (1, tb) output tile
    vmem_limit = 2 * x_tile_bytes + 2 * o_tile_bytes + 4 * h_bytes + (8 << 20)
    vmem_limit = max(vmem_limit, 32 << 20)
    vmem_limit = min(vmem_limit, 48 << 20)

    cost = pl.CostEstimate(
        flops=2 * B * in_dim * hid + 2 * B * hid + B * hid,
        transcendentals=0,
        bytes_accessed=4 * (x.size + B + w1.size + b1.size + w2.size + b2.size),
    )

    out = pl.pallas_call(
        mlp_kernel,
        out_shape=jax.ShapeDtypeStruct((1, B), jnp.float32),
        grid=grid,
        in_specs=[
            # x tiles walk the batch (sublane) axis of the row-major input.
            pl.BlockSpec((tb, in_dim), lambda i: (i, 0)),
            # Parameters: constant block index -> DMA'd once, stay VMEM-resident.
            pl.BlockSpec((hid, in_dim), lambda i: (0, 0)),
            pl.BlockSpec((hid, 1), lambda i: (0, 0)),
            pl.BlockSpec((hid, 1), lambda i: (0, 0)),
            pl.BlockSpec((1, 1), lambda i: (0, 0)),
        ],
        out_specs=pl.BlockSpec((1, tb), lambda i: (0, i)),
        compiler_params=pltpu.CompilerParams(
            dimension_semantics=("parallel",),
            vmem_limit_bytes=vmem_limit,
        ),
        cost_estimate=cost,
    )(x, w1, b1_col, w2_col, b2_2d)

    # (1, B) lane-dense slab -> (B, 1); pure reshape (layout-identical), no transpose.
    return out.reshape(B, 1)


def init_params(key, in_dim=10, hid_dim=20, out_dim=1):
    # Deterministic init mirroring nn.Linear's default
    # uniform(-1/sqrt(fan_in), 1/sqrt(fan_in)), PyTorch-native layouts.
    k1, k2, k3, k4 = jax.random.split(key, 4)
    lim1 = 1.0 / jnp.sqrt(in_dim)
    lim2 = 1.0 / jnp.sqrt(hid_dim)
    w1 = jax.random.uniform(k1, (hid_dim, in_dim), jnp.float32, -lim1, lim1)
    b1 = jax.random.uniform(k2, (hid_dim,), jnp.float32, -lim1, lim1)
    w2 = jax.random.uniform(k3, (out_dim, hid_dim), jnp.float32, -lim2, lim2)
    b2 = jax.random.uniform(k4, (out_dim,), jnp.float32, -lim2, lim2)
    return w1, b1, w2, b2


if __name__ == "__main__":
    key = jax.random.PRNGKey(0)
    kx, kp = jax.random.split(key)

    B, IN, HID, OUT = 2, 10, 20, 1  # module forward implies [batch, 10] inputs
    x = jax.random.normal(kx, (B, IN), jnp.float32)
    w1, b1, w2, b2 = init_params(kp, in_dim=IN, hid_dim=HID, out_dim=OUT)

    out = mlp_forward(x, w1, b1, w2, b2)
    out = jax.block_until_ready(out)

    # Pure-JAX reference of the same math (PyTorch layouts: y = x @ W.T + b).
    ref = jnp.maximum(x @ w1.T + b1, 0.0) @ w2.T + b2
    assert out.shape == (B, OUT)
    assert jnp.allclose(out, ref, atol=1e-5, rtol=1e-5)

    print("KERNEL_OK")
</pallas_src>

<mosaic_0001>
module attributes {stable_mosaic.version = 11 : i64} {
  func.func @mlp_kernel(%arg0: i32, %arg1: memref<2x10xf32, #tpu.memory_space<vmem>>, %arg2: memref<20x10xf32, #tpu.memory_space<vmem>>, %arg3: memref<20x1xf32, #tpu.memory_space<vmem>>, %arg4: memref<20x1xf32, #tpu.memory_space<vmem>>, %arg5: memref<1x1xf32, #tpu.memory_space<vmem>>, %arg6: memref<1x2xf32, #tpu.memory_space<vmem>>) attributes {dimension_semantics = [#tpu.dimension_semantics<parallel>], iteration_bounds = array<i64: 1>, scalar_prefetch = 0 : i64, scratch_operands = 0 : i64, tpu.core_type = #tpu.core_type<tc>, window_params = [{transform_indices = @transform_0, window_bounds = array<i64: 2, 10>}, {pipeline_mode = #tpu.pipeline_mode<synchronous>, transform_indices = @transform_1, window_bounds = array<i64: 20, 10>}, {pipeline_mode = #tpu.pipeline_mode<synchronous>, transform_indices = @transform_2, window_bounds = array<i64: 20, 1>}, {pipeline_mode = #tpu.pipeline_mode<synchronous>, transform_indices = @transform_3, window_bounds = array<i64: 20, 1>}, {pipeline_mode = #tpu.pipeline_mode<synchronous>, transform_indices = @transform_4, window_bounds = array<i64: 1, 1>}, {transform_indices = @transform_5, window_bounds = array<i64: 1, 2>}]} {
    %c0 = arith.constant 0 : index
    %c0_0 = arith.constant 0 : index
    %0 = vector.load %arg2[%c0, %c0_0] : memref<20x10xf32, #tpu.memory_space<vmem>>, vector<20x10xf32>
    %c0_1 = arith.constant 0 : index
    %c0_2 = arith.constant 0 : index
    %1 = vector.load %arg1[%c0_1, %c0_2] : memref<2x10xf32, #tpu.memory_space<vmem>>, vector<2x10xf32>
    %cst = arith.constant dense<0.000000e+00> : vector<20x2xf32>
    %2 = tpu.matmul %0, %1, %cst {dimension_numbers = #tpu.dot_dimension_numbers<[1], [1], [0], [0], [0, 0, 1, 0], [], []>} : vector<20x10xf32>, vector<2x10xf32>, vector<20x2xf32> -> vector<20x2xf32>
    %c0_3 = arith.constant 0 : index
    %c0_4 = arith.constant 0 : index
    %3 = vector.load %arg3[%c0_3, %c0_4] : memref<20x1xf32, #tpu.memory_space<vmem>>, vector<20x1xf32>
    %4 = vector.broadcast %3 : vector<20x1xf32> to vector<20x2xf32>
    %5 = arith.addf %2, %4 : vector<20x2xf32>
    %cst_5 = arith.constant 0.000000e+00 : f32
    %6 = vector.broadcast %cst_5 : f32 to vector<20x2xf32>
    %7 = arith.maximumf %5, %6 : vector<20x2xf32>
    %c0_6 = arith.constant 0 : index
    %c0_7 = arith.constant 0 : index
    %8 = vector.load %arg4[%c0_6, %c0_7] : memref<20x1xf32, #tpu.memory_space<vmem>>, vector<20x1xf32>
    %9 = vector.broadcast %8 : vector<20x1xf32> to vector<20x2xf32>
    %10 = arith.mulf %7, %9 : vector<20x2xf32>
    %cst_8 = arith.constant dense<0.000000e+00> : vector<2xf32>
    %11 = vector.multi_reduction <add>, %10, %cst_8 [0] : vector<20x2xf32> to vector<2xf32>
    %12 = vector.shape_cast %11 : vector<2xf32> to vector<1x2xf32>
    %c0_9 = arith.constant 0 : index
    %c0_10 = arith.constant 0 : index
    %13 = vector.load %arg5[%c0_9, %c0_10] : memref<1x1xf32, #tpu.memory_space<vmem>>, vector<1x1xf32>
    %14 = vector.broadcast %13 : vector<1x1xf32> to vector<1x2xf32>
    %15 = arith.addf %12, %14 : vector<1x2xf32>
    %c0_11 = arith.constant 0 : index
    %c0_12 = arith.constant 0 : index
    %16 = vector.load %arg6[%c0_11, %c0_12] : memref<1x2xf32, #tpu.memory_space<vmem>>, vector<1x2xf32>
    tpu.vector_store %arg6[%c0_11, %c0_12], %15 {strides = array<i32>} : memref<1x2xf32, #tpu.memory_space<vmem>>, vector<1x2xf32>,
    return
  }
  func.func @transform_0(%arg0: i32) -> (i32, i32) {
    %c0_i32 = arith.constant 0 : i32
    %c0_i32_0 = arith.constant 0 : i32
    return %arg0, %c0_i32 : i32, i32
  }
  func.func @transform_1(%arg0: i32) -> (i32, i32) {
    %c0_i32 = arith.constant 0 : i32
    %c0_i32_0 = arith.constant 0 : i32
    %c0_i32_1 = arith.constant 0 : i32
    return %c0_i32, %c0_i32_0 : i32, i32
  }
  func.func @transform_2(%arg0: i32) -> (i32, i32) {
    %c0_i32 = arith.constant 0 : i32
    %c0_i32_0 = arith.constant 0 : i32
    %c0_i32_1 = arith.constant 0 : i32
    return %c0_i32, %c0_i32_0 : i32, i32
  }
  func.func @transform_3(%arg0: i32) -> (i32, i32) {
    %c0_i32 = arith.constant 0 : i32
    %c0_i32_0 = arith.constant 0 : i32
    %c0_i32_1 = arith.constant 0 : i32
    return %c0_i32, %c0_i32_0 : i32, i32
  }
  func.func @transform_4(%arg0: i32) -> (i32, i32) {
    %c0_i32 = arith.constant 0 : i32
    %c0_i32_0 = arith.constant 0 : i32
    %c0_i32_1 = arith.constant 0 : i32
    return %c0_i32, %c0_i32_0 : i32, i32
  }
  func.func @transform_5(%arg0: i32) -> (i32, i32) {
    %c0_i32 = arith.constant 0 : i32
    %c0_i32_0 = arith.constant 0 : i32
    return %c0_i32, %arg0 : i32, i32
  }
}

</mosaic_0001>

<llo_original>
// kernel: tpu_custom_call.1
$region0: #{tpu_custom_call.1}
  #allocation0 [shape = 'u32[]', space=smem, size = 0x4, offset = 0x4, fixed_abs, tag = 'smem constant byte address 0x4 - core index']
  #allocation1 [shape = 'u32[144,128]{1,0:T(1,128)}', space=vmem, size = 0x12000, scoped, tag = 'internal scratch']
  #allocation2 [shape = 'f32[1,1]{1,0:T(1,128)S(1)}', space=vmem, size = 0x200, scoped, tag = 'scoped memory for tpu_custom_call.1']
  %s0 = inlined_call_operand.vmem [shape: f32[2,10], index: 0, kind: input, shape index: {}]
  %s1 = inlined_call_operand.vmem [shape: f32[20,10], index: 1, kind: input, shape index: {}]
  %s2 = inlined_call_operand.vmem [shape: f32[20,1], index: 2, kind: input, shape index: {}]
  %s3 = inlined_call_operand.vmem [shape: f32[20,1], index: 3, kind: input, shape index: {}]
  %s4 = inlined_call_operand.<no memory space> [shape: f32[1,1], index: 4, kind: input, shape index: {}]
  %s5 = inlined_call_operand.hbm [shape: f32[1,2], index: 5, kind: output, shape index: {}]
  %s6 = sld [smem:[#allocation0]]
  $region30: #{tpu_custom_call.1} parent=0
    _
  %s8 = ssub.s32 1, %s6
  %s9 = scalar_select 0, %s8, %s6
  %v10 = vstv %s4
  %11 = vst [vmem:[#allocation2] sm:$0x1] %v10
  $region1: #{tpu_custom_call.1} parent=0
    #allocation3 [shape = 'u8[512]{0}', space=vmem, size = 0x400, scoped, tag = 'output window, operand 0, single buffered']
    #allocation4 [shape = 's32[1]{0}', space=sflag, size = 0x4, scoped, tag = 'scoped memory for tpu_custom_call.1']
    %12 = vsyncpa [#allocation4], 0
    // Predicated region
    $region2: #{tpu_custom_call.1} parent=1 // pred_check
      _
    $region3: #{tpu_custom_call.1} parent=1 // pred_check_branch
      %14 = sbr.rel (0) target = $region5
    $region4: #{tpu_custom_call.1} parent=1 // pred_region
      _
    $region5: #{tpu_custom_call.1} parent=1 // pred_fallthru
      _
    // Predicated region
    $region6: #{tpu_custom_call.1} parent=1 // pred_check
      _
    $region7: #{tpu_custom_call.1} parent=1 // pred_check_branch
      %16 = sbr.rel (0) target = $region9
    $region8: #{tpu_custom_call.1} parent=1 // pred_region
      _
    $region9: #{tpu_custom_call.1} parent=1 // pred_fallthru
      _
    // Predicated region
    $region10: #{tpu_custom_call.1} parent=1 // pred_check
      _
    $region11: #{tpu_custom_call.1} parent=1 // pred_check_branch
      %18 = sbr.rel (0) target = $region13
    $region12: #{tpu_custom_call.1} parent=1 // pred_region
      _
    $region13: #{tpu_custom_call.1} parent=1 // pred_fallthru
      _
    // Predicated region
    $region14: #{tpu_custom_call.1} parent=1 // pred_check
      _
    $region15: #{tpu_custom_call.1} parent=1 // pred_check_branch
      %20 = sbr.rel (0) target = $region17
    $region16: #{tpu_custom_call.1} parent=1 // pred_region
      _
    $region17: #{tpu_custom_call.1} parent=1 // pred_fallthru
      _
    // Predicated region
    $region18: #{tpu_custom_call.1} parent=1 // pred_check
      _
    $region19: #{tpu_custom_call.1} parent=1 // pred_check_branch
      %22 = sbr.rel (0) target = $region21
    $region20: #{tpu_custom_call.1} parent=1 // pred_region
      _
    $region21: #{tpu_custom_call.1} parent=1 // pred_fallthru
      _
    %v23 = vld [vmem:[%s1] sm:$0xff]
    %v24 = vld [vmem:[%s1 + $0x8] sm:$0xff]
    %v25 = vld [vmem:[%s1 + $0x10] sm:$0xf]
    %v26 = vld [vmem:[%s0] sm:$0x3]
    %v27 = vld [vmem:[%s2] sm:$0xff]
    %v28 = vld [vmem:[%s2 + $0x8] sm:$0xff]
    %v29 = vld [vmem:[%s2 + $0x10] sm:$0xf]
    %31 = vset.pattern.permute.xlu0 0
    %32 = vperm.xlu0 %31, %v27
    %v33 = vpop.permute.xlu0 %32
    %36 = vset.pattern.permute.xlu0 0
    %37 = vperm.xlu0 %36, %v28
    %v38 = vpop.permute.xlu0 %37
    %41 = vset.pattern.permute.xlu0 0
    %42 = vperm.xlu0 %41, %v29
    %v43 = vpop.permute.xlu0 %42
    %vm45 = vcmask 80896
    %v47 = vsel %vm45, %v23, 0
    %v50 = vsel %vm45, %v24, 0
    %v53 = vsel %vm45, %v25, 0
    %v56 = vsel %vm45, %v26, 0
    %58 = vmatprep.subr.mxu0 0.0
    %59 = vmatpush1.xpose.msra.mxu0 %v56
    %60 = vmatprep.subr.mxu0 0.0
    %61 = vmatpush1.xpose.msra.mxu0 0.0
    %62 = vmatprep.subr.mxu0 0.0
    %63 = vmatpush1.xpose.msra.mxu0 0.0
    %64 = vmatprep.subr.mxu0 0.0
    %65 = vmatpush1.xpose.msra.mxu0 0.0
    %66 = vmatprep.subr.mxu0 0.0
    %67 = vmatpush1.xpose.msra.mxu0 0.0
    %68 = vmatprep.subr.mxu0 0.0
    %69 = vmatpush1.xpose.msra.mxu0 0.0
    %70 = vmatprep.subr.mxu0 0.0
    %71 = vmatpush1.xpose.msra.mxu0 0.0
    %72 = vmatprep.subr.mxu0 0.0
    %73 = vmatpush1.xpose.msra.mxu0 0.0
    %74 = vmatprep.subr.mxu0 0.0
    %75 = vmatpush1.xpose.msra.mxu0 0.0
    %76 = vmatprep.subr.mxu0 0.0
    %77 = vmatpush1.xpose.msra.mxu0 0.0
    %78 = vmatprep.subr.mxu0 0.0
    %79 = vmatpush1.xpose.msra.mxu0 0.0
    %80 = vmatprep.subr.mxu0 0.0
    %81 = vmatpush1.xpose.msra.mxu0 0.0
    %82 = vmatprep.subr.mxu0 0.0
    %83 = vmatpush1.xpose.msra.mxu0 0.0
    %84 = vmatprep.subr.mxu0 0.0
    %85 = vmatpush1.xpose.msra.mxu0 0.0
    %86 = vmatprep.subr.mxu0 0.0
    %87 = vmatpush1.xpose.msra.mxu0 0.0
    %88 = vmatprep.subr.mxu0 0.0
    %89 = vmatpush1.xpose.msra.mxu0 0.0
    %90 = vmatprep.subr.mxu0 0.0
    %91 = vmatpush1.xpose.msra.mxu0 0.0
    %92 = vmatprep.subr.mxu0 0.0
    %93 = vmatpush1.xpose.msra.mxu0 0.0
    %94 = vmatprep.subr.mxu0 0.0
    %95 = vmatpush1.xpose.msra.mxu0 0.0
    %96 = vmatprep.subr.mxu0 0.0
    %97 = vmatpush1.xpose.msra.mxu0 0.0
    %98 = vmatprep.subr.mxu0 0.0
    %99 = vmatpush1.xpose.msra.mxu0 0.0
    %100 = vmatprep.subr.mxu0 0.0
    %101 = vmatpush1.xpose.msra.mxu0 0.0
    %102 = vmatprep.subr.mxu0 0.0
    %103 = vmatpush1.xpose.msra.mxu0 0.0
    %104 = vmatprep.subr.mxu0 0.0
    %105 = vmatpush1.xpose.msra.mxu0 0.0
    %106 = vmatprep.subr.mxu0 0.0
    %107 = vmatpush1.xpose.msra.mxu0 0.0
    %108 = vmatprep.subr.mxu0 0.0
    %109 = vmatpush1.xpose.msra.mxu0 0.0
    %110 = vmatprep.subr.mxu0 0.0
    %111 = vmatpush1.xpose.msra.mxu0 0.0
    %112 = vmatprep.subr.mxu0 0.0
    %113 = vmatpush1.xpose.msra.mxu0 0.0
    %114 = vmatprep.subr.mxu0 0.0
    %115 = vmatpush1.xpose.msra.mxu0 0.0
    %116 = vmatprep.subr.mxu0 0.0
    %117 = vmatpush1.xpose.msra.mxu0 0.0
    %118 = vmatprep.subr.mxu0 0.0
    %119 = vmatpush1.xpose.msra.mxu0 0.0
    %120 = vmatprep.subr.mxu0 0.0
    %121 = vmatpush1.xpose.msra.mxu0 0.0
    %122 = vmatprep.mubr.f32.mxu0 0.0
    %123 = vmatmul.mubr.f32.gmra.mrb[0].mxu0 %v47
    %v124 = vpop.f32.mrb[0].mxu0
    %v125 = vadd.f32 %v33, %v124
    %v126 = vpop.f32.mrb[0].mxu0
    %127 = vmatprep.mubr.f32.mxu0 0.0
    %128 = vmatmul.mubr.f32.gmra.mrb[0].mxu0 %v50
    %v129 = vpop.f32.mrb[0].mxu0
    %v130 = vadd.f32 %v38, %v129
    %v131 = vpop.f32.mrb[0].mxu0
    %132 = vmatprep.mubr.f32.mxu0 0.0
    %133 = vmatmul.mubr.f32.gmra.mrb[0].mxu0 %v53
    %v134 = vpop.f32.mrb[0].mxu0
    %v135 = vadd.f32 %v43, %v134
    %v136 = vpop.f32.mrb[0].mxu0
    %137 = vdwg.mxu0
    %v138 = vmax.f32 %v125, 0.0
    %v139 = vmax.f32 %v130, 0.0
    %v140 = vmax.f32 %v135, 0.0
    %v141 = vld [vmem:[%s3] sm:$0xff]
    %v142 = vld [vmem:[%s3 + $0x8] sm:$0xff]
    %v143 = vld [vmem:[%s3 + $0x10] sm:$0xf]
    %145 = vset.pattern.permute.xlu0 0
    %146 = vperm.xlu0 %145, %v141
    %v147 = vpop.permute.xlu0 %146
    %150 = vset.pattern.permute.xlu0 0
    %151 = vperm.xlu0 %150, %v142
    %v152 = vpop.permute.xlu0 %151
    %155 = vset.pattern.permute.xlu0 0
    %156 = vperm.xlu0 %155, %v143
    %v157 = vpop.permute.xlu0 %156
    %v159 = vmul.f32 %v138, %v147
    %v160 = vmul.f32 %v139, %v152
    %v161 = vmul.f32 %v140, %v157
    %vm162 = vcmask 15360
    %v163 = vsel %vm162, %v159, 0.0
    %v164 = vsel %vm162, %v160, 0.0
    %v165 = vadd.f32 %v163, %v164
    %vm166 = vcmask 11264
    %v167 = vsel %vm166, %v161, 0.0
    %v168 = vadd.f32 %v165, %v167
    %v169 = vrot.slane %v168, 4
    %v170 = vadd.f32 %v168, %v169
    %v171 = vrot.slane %v170, 2
    %v172 = vadd.f32 %v170, %v171
    %v173 = vrot.slane %v172, 1
    %v174 = vadd.f32 %v172, %v173
    %v175 = vld [vmem:[#allocation2] sm:$0x1]
    %177 = vset.pattern.permute.xlu0 0
    %178 = vperm.xlu0 %177, %v175
    %v179 = vpop.permute.xlu0 %178
    %v181 = vlaneseq
    %v182 = vshrl.u32 %v181, 7
    %v183 = vsub.s32 0, %v182
    %v184 = vrot.slane %v179, %v183
    %v185 = vadd.f32 %v174, %v184
    %vm186 = vcmask 8192
    %187 = vst.msk [vmem:[#allocation3] sm:$0x1] %vm186, %v185
    // Predicated region
    $region22: #{tpu_custom_call.1} parent=1 // pred_check
      _
    $region23: #{tpu_custom_call.1} parent=1 // pred_check_branch
      %189 = sbr.rel (0) target = $region25
    $region24: #{tpu_custom_call.1} parent=1 // pred_region
      %s191 = ssub.s32 16, 16
      %192 = vsyncadd [#allocation4], %s191
      %s194 = sshll.u32 [#allocation3], 4
      %s195 = int_to_ptr.vmem [resolvable:$true] %s194
      %197 = dma.vmem_to_hbm [thread:$0]  %s195, 16, %s5, [#allocation4]
    $region25: #{tpu_custom_call.1} parent=1 // pred_fallthru
      _
    // Predicated region
    $region26: #{tpu_custom_call.1} parent=1 // pred_check
      _
    $region27: #{tpu_custom_call.1} parent=1 // pred_check_branch
      %199 = sbr.rel (0) target = $region29
    $region28: #{tpu_custom_call.1} parent=1 // pred_region
      %200 = dma.done [#allocation4], 16
    $region29: #{tpu_custom_call.1} parent=1 // pred_fallthru
      _
    %201 = vsyncpa [#allocation4], 1

</llo_original>
